<compile_context>
chip_gen: v6e
topology: v6e:2x2x1
jax: 0.10.0
libtpu: 0.0.40
codegen_flags: <defaults>
</compile_context>

<pallas_src>
import math
import functools

import jax
import jax.numpy as jnp
from jax.experimental import pallas as pl
from jax.experimental.pallas import tpu as pltpu


def _round_up(x, m):
    return (x + m - 1) // m * m


def _embedding_gather_kernel(ids_ref, lut_hbm, out_ref, row_buf, sem,
                             *, tok_blk, vocab, scale):
    # ids_ref : (N_pad,) int32 token ids, scalar-prefetched into SMEM
    # lut_hbm : (vocab, d_model) embedding table, left in HBM (pl.ANY)
    # out_ref : (tok_blk, d_model) output block in VMEM
    # row_buf : (tok_blk, d_model) VMEM gather scratch
    # sem     : single DMA semaphore shared by all row copies of this block
    base = pl.program_id(0) * tok_blk

    # Issue all row-gather DMAs for this token block; keeping many copies in
    # flight hides HBM latency.  Ids are clamped to [0, vocab) — PyTorch would
    # raise on out-of-range ids; here the documented contract is in-range ids.
    @pl.loop(0, tok_blk)
    def _issue(j):
        tok = ids_ref[base + j]
        tok = jnp.clip(tok, 0, vocab - 1)
        pltpu.make_async_copy(lut_hbm.at[tok], row_buf.at[j], sem).start()

    # Drain: one wait per issued copy (all copies are the same size and share
    # one DMA semaphore, so the decrements match the signals).
    @pl.loop(0, tok_blk)
    def _drain(j):
        pltpu.make_async_copy(lut_hbm.at[0], row_buf.at[j], sem).wait()

    out_ref[...] = (row_buf[...] * scale).astype(out_ref.dtype)


def embeddings_forward(x, lut, *, tok_blk=128):
    """x: (B, S) integer token ids; lut: (vocab, d_model) float32.
    Returns (B, S, d_model) = lut[x] * sqrt(d_model)."""
    B, S = x.shape
    vocab, d_model = lut.shape
    N = B * S
    scale = math.sqrt(d_model)

    # Token block: multiple of 8 (sublane), capped at the requested size, and
    # no larger than the (padded) token count for tiny inputs.
    tb = min(tok_blk, _round_up(N, 8))
    tb = _round_up(tb, 8)
    n_pad = _round_up(N, tb)

    ids_flat = x.reshape(N).astype(jnp.int32)
    if n_pad != N:
        # Pad with a valid id (0); padded rows are trimmed after the call.
        ids_flat = jnp.concatenate(
            [ids_flat, jnp.zeros((n_pad - N,), jnp.int32)])

    kernel = functools.partial(
        _embedding_gather_kernel, tok_blk=tb, vocab=vocab, scale=scale)

    out_flat = pl.pallas_call(
        kernel,
        out_shape=jax.ShapeDtypeStruct((n_pad, d_model), lut.dtype),
        grid_spec=pltpu.PrefetchScalarGridSpec(
            num_scalar_prefetch=1,                        # ids -> SMEM
            grid=(n_pad // tb,),
            in_specs=[pl.BlockSpec(memory_space=pl.ANY)],  # LUT stays in HBM
            out_specs=pl.BlockSpec((tb, d_model), lambda i, ids: (i, 0)),
            scratch_shapes=[
                pltpu.VMEM((tb, d_model), lut.dtype),     # gather buffer
                pltpu.SemaphoreType.DMA(()),              # shared DMA semaphore
            ],
        ),
        compiler_params=pltpu.CompilerParams(
            # Token axis is fully parallel -> shards across both TCs on v7x.
            dimension_semantics=("parallel",)),
    )(ids_flat, lut)

    return out_flat[:N].reshape(B, S, d_model)


if __name__ == "__main__":
    # Small deterministic setup consistent with the module.  d_model is a
    # multiple of 128 so output blocks are lane-dense (unmasked vector stores).
    B, S = 2, 8          # batch, sequence length
    d_model = 128
    vocab = 64

    key = jax.random.PRNGKey(0)
    k_lut, k_ids = jax.random.split(key)

    # nn.Embedding default init: weight ~ N(0, 1)
    lut = jax.random.normal(k_lut, (vocab, d_model), dtype=jnp.float32)
    x = jax.random.randint(k_ids, (B, S), 0, vocab, dtype=jnp.int32)

    out = embeddings_forward(x, lut)
    out = jax.block_until_ready(out)

    # Reference check in plain JAX.
    ref = lut[x] * math.sqrt(d_model)
    assert out.shape == (B, S, d_model)
    assert jnp.allclose(out, ref, atol=1e-5), "mismatch vs reference"

    print("KERNEL_OK")
</pallas_src>

<mosaic_0001>
module attributes {stable_mosaic.version = 11 : i64} {
  func.func @_embedding_gather_kernel(%arg0: i32, %arg1: memref<16xi32, #tpu.memory_space<smem>>, %arg2: memref<64x128xf32, #tpu.memory_space<any>>, %arg3: memref<16x128xf32, #tpu.memory_space<vmem>>, %arg4: memref<16x128xf32, #tpu.memory_space<vmem>>, %arg5: memref<!tpu.dma_semaphore, #tpu.memory_space<semaphore_mem>>) attributes {dimension_semantics = [#tpu.dimension_semantics<parallel>], iteration_bounds = array<i64: 1>, scalar_prefetch = 1 : i64, scratch_operands = 2 : i64, tpu.core_type = #tpu.core_type<tc>, window_params = [{}, {transform_indices = @transform_1, window_bounds = array<i64: 16, 128>}]} {
    %c16_i32 = arith.constant 16 : i32
    %0 = arith.muli %arg0, %c16_i32 : i32
    %c0_i32 = arith.constant 0 : i32
    %c16_i32_0 = arith.constant 16 : i32
    %1 = arith.addi %c0_i32, %c16_i32_0 : i32
    %c1_i32 = arith.constant 1 : i32
    scf.for %arg6 = %c0_i32 to %1 step %c1_i32  : i32 {
      %c1_i32_9 = arith.constant 1 : i32
      %7 = arith.muli %arg6, %c1_i32_9 : i32
      %c0_i32_10 = arith.constant 0 : i32
      %8 = arith.addi %c0_i32_10, %7 : i32
      %9 = arith.addi %0, %8 : i32
      %10 = arith.index_cast %9 : i32 to index
      %11 = memref.load %arg1[%10] : memref<16xi32, #tpu.memory_space<smem>>
      %c0_i32_11 = arith.constant 0 : i32
      %c63_i32 = arith.constant 63 : i32
      %12 = arith.maxsi %c0_i32_11, %11 : i32
      %13 = arith.minsi %c63_i32, %12 : i32
      %c0_i32_12 = arith.constant 0 : i32
      %14 = tpu.memref_slice %arg2[%13, %c0_i32_12] : memref<64x128xf32, #tpu.memory_space<any>> -> memref<1x128xf32, #tpu.memory_space<any>>
      %15 = tpu.memref_squeeze %14 : memref<1x128xf32, #tpu.memory_space<any>> -> memref<128xf32, #tpu.memory_space<any>>
      %c0_i32_13 = arith.constant 0 : i32
      %16 = tpu.memref_slice %arg4[%8, %c0_i32_13] : memref<16x128xf32, #tpu.memory_space<vmem>> -> memref<1x128xf32, #tpu.memory_space<vmem>>
      %17 = tpu.memref_squeeze %16 : memref<1x128xf32, #tpu.memory_space<vmem>> -> memref<128xf32, #tpu.memory_space<vmem>>
      tpu.enqueue_dma source(%15 : memref<128xf32, #tpu.memory_space<any>>) target(%17 : memref<128xf32, #tpu.memory_space<vmem>>) target_semaphore(%arg5 : memref<!tpu.dma_semaphore, #tpu.memory_space<semaphore_mem>>)
    }
    %c16_i32_1 = arith.constant 16 : i32
    %c0_i32_2 = arith.constant 0 : i32
    %c16_i32_3 = arith.constant 16 : i32
    %2 = arith.addi %c0_i32_2, %c16_i32_3 : i32
    %c1_i32_4 = arith.constant 1 : i32
    scf.for %arg6 = %c0_i32_2 to %2 step %c1_i32_4  : i32 {
      %c1_i32_9 = arith.constant 1 : i32
      %7 = arith.muli %arg6, %c1_i32_9 : i32
      %c0_i32_10 = arith.constant 0 : i32
      %8 = arith.addi %c0_i32_10, %7 : i32
      %c0_i32_11 = arith.constant 0 : i32
      %c0_i32_12 = arith.constant 0 : i32
      %9 = tpu.memref_slice %arg2[%c0_i32_11, %c0_i32_12] : memref<64x128xf32, #tpu.memory_space<any>> -> memref<1x128xf32, #tpu.memory_space<any>>
      %10 = tpu.memref_squeeze %9 : memref<1x128xf32, #tpu.memory_space<any>> -> memref<128xf32, #tpu.memory_space<any>>
      %c0_i32_13 = arith.constant 0 : i32
      %11 = tpu.memref_slice %arg4[%8, %c0_i32_13] : memref<16x128xf32, #tpu.memory_space<vmem>> -> memref<1x128xf32, #tpu.memory_space<vmem>>
      %12 = tpu.memref_squeeze %11 : memref<1x128xf32, #tpu.memory_space<vmem>> -> memref<128xf32, #tpu.memory_space<vmem>>
      tpu.wait_dma2 semaphore(%arg5 : memref<!tpu.dma_semaphore, #tpu.memory_space<semaphore_mem>>) src(%10 : memref<128xf32, #tpu.memory_space<any>>) dst(%12 : memref<128xf32, #tpu.memory_space<vmem>>)
    }
    %c16_i32_5 = arith.constant 16 : i32
    %c0 = arith.constant 0 : index
    %c0_6 = arith.constant 0 : index
    %3 = vector.load %arg4[%c0, %c0_6] : memref<16x128xf32, #tpu.memory_space<vmem>>, vector<16x128xf32>
    %cst = arith.constant 11.3137083 : f32
    %4 = vector.broadcast %cst : f32 to vector<16x128xf32>
    %5 = arith.mulf %3, %4 : vector<16x128xf32>
    %c0_7 = arith.constant 0 : index
    %c0_8 = arith.constant 0 : index
    %6 = vector.load %arg3[%c0_7, %c0_8] : memref<16x128xf32, #tpu.memory_space<vmem>>, vector<16x128xf32>
    tpu.vector_store %arg3[%c0_7, %c0_8], %5 {strides = array<i32>} : memref<16x128xf32, #tpu.memory_space<vmem>>, vector<16x128xf32>,
    return
  }
  func.func @transform_1(%arg0: i32, %arg1: memref<16xi32, #tpu.memory_space<smem>>) -> (i32, i32) {
    %c0_i32 = arith.constant 0 : i32
    %c0_i32_0 = arith.constant 0 : i32
    return %arg0, %c0_i32 : i32, i32
  }
}

</mosaic_0001>

<llo_original>
// kernel: tpu_custom_call.1
$region0: #{tpu_custom_call.1}
  #allocation0 [shape = 'u32[]', space=smem, size = 0x4, offset = 0x4, fixed_abs, tag = 'smem constant byte address 0x4 - core index']
  #allocation1 [shape = 'u32[144,128]{1,0:T(1,128)}', space=vmem, size = 0x12000, scoped, tag = 'internal scratch']
  #allocation2 [shape = 'f32[16,128]{1,0:T(8,128)}', space=vmem, size = 0x2000, scoped, tag = 'scratch operand']
  #allocation3 [shape = 's32[1]{0}', space=sflag, size = 0x4, scoped, tag = 'scratch operand']
  #allocation4 [shape = 's32[1]{0}', space=sflag, size = 0x4, scoped, tag = 'scoped memory for tpu_custom_call.1']
  #allocation5 [shape = 'u8[512]{0}', space=smem, size = 0x200, scoped, tag = 'prefetched SMEM operand 0']
  #allocation8 [shape = 's32[]', space=sflag, size = 0x4, offset = 0, fixed_abs, tag = 'sflag constant byte address 0x0 - dummy sync flag']
  #allocation9 [shape = 's32[]', space=sflag, size = 0x4, offset = 0, fixed_abs, tag = 'sflag constant byte address 0x0 - dummy sync flag']
  #allocation10 [shape = 'u32[]', space=smem, size = 0x4, offset = 0x44, fixed_abs, tag = 'smem constant byte address 0x44 - assertion arg 0']
  #allocation11 [shape = 'u32[]', space=smem, size = 0x4, offset = 0x48, fixed_abs, tag = 'smem constant byte address 0x48 - assertion arg 1']
  %s0 = inlined_call_operand.hbm [shape: s32[16], index: 0, kind: input, shape index: {}]
  %s1 = inlined_call_operand.hbm [shape: f32[64,128], index: 1, kind: input, shape index: {}]
  %s2 = inlined_call_operand.hbm [shape: f32[16,128], index: 2, kind: output, shape index: {}]
  %s3 = sld [smem:[#allocation0]]
  $region28: #{tpu_custom_call.1} parent=0
    _
  %s5 = ssub.s32 1, %s3
  %s6 = scalar_select 0, %s5, %s3
  %8 = dma.hbm_to_smem %s0, 16, [#allocation5], [#allocation4]
  %9 = dma.done [#allocation4], 16
  %10 = sfence
  $region1: #{tpu_custom_call.1} parent=0
    #allocation6 [shape = 'u8[8192]{0}', space=vmem, size = 0x2000, scoped, tag = 'output window, operand 0, single buffered']
    #allocation7 [shape = 's32[1]{0}', space=sflag, size = 0x4, scoped, tag = 'scoped memory for tpu_custom_call.1']
    %11 = vsyncpa [#allocation7], 0
    %s12 = smul.u32 0, 16
    loop: start=0, step=1, limit=16
    $region2: #{tpu_custom_call.1} parent=1 // loop_pre_header
      _
    $region3: #{tpu_custom_call.1} parent=1 // loop_header
      %s14 = sphi 0, %s18
      %p15 = scmp.ge.s32.totalorder %s14, 16
    $region4: #{tpu_custom_call.1} parent=1 // loop_header_branch
      %17 = sbr.rel (%p15) target = $region8
    $region5: #{tpu_custom_call.1} parent=1 // loop_body
      %s19 = sadd.s32 %s12, %s14
      %s20 = sld [smem:[#allocation5 + %s19]]
      %p21 = scmp.gt.s32.totalorder %s20, 0
      %s22 = scalar_select %p21, %s20, 0
      %p23 = scmp.lt.s32.totalorder %s22, 63
      %s24 = scalar_select %p23, %s22, 63
      %s25 = smul.addr %s24, 16
      %s26 = scalar_lea.hbm %s1, %s25
      %s27 = scalar_lea.vmem [#allocation2], %s14
      // Predicated region
      $region9: #{tpu_custom_call.1} parent=5 // pred_check
        _
      $region10: #{tpu_custom_call.1} parent=5 // pred_check_branch
        %29 = sbr.rel target = $region12
      $region11: #{tpu_custom_call.1} parent=5 // pred_region
        %30 = sst [smem:[#allocation10]] [#allocation9]
        %31 = sst [smem:[#allocation11]] [#allocation8]
      $region12: #{tpu_custom_call.1} parent=5 // pred_fallthru
        _
      %33 = shalt.err (0)
      %s35 = sshll.u32 %s27, 4
      %s36 = int_to_ptr.vmem [resolvable:$true] %s35
      %38 = dma.hbm_to_vmem [thread:$0]  %s26, 16, %s36, [#allocation3]
    $region6: #{tpu_custom_call.1} parent=1 // loop_footer
      %s18 = sadd.s32 1, %s14
    $region7: #{tpu_custom_call.1} parent=1 // loop_footer_branch
      %13 = sbr.rel target = $region3
    $region8: #{tpu_custom_call.1} parent=1 // loop_exit
      _
    loop: start=0, step=1, limit=16
    $region13: #{tpu_custom_call.1} parent=1 // loop_pre_header
      _
    $region14: #{tpu_custom_call.1} parent=1 // loop_header
      %s40 = sphi 0, %s44
      %p41 = scmp.ge.s32.totalorder %s40, 16
    $region15: #{tpu_custom_call.1} parent=1 // loop_header_branch
      %43 = sbr.rel (%p41) target = $region19
    $region16: #{tpu_custom_call.1} parent=1 // loop_body
      %46 = dma.done [#allocation3], 16
    $region17: #{tpu_custom_call.1} parent=1 // loop_footer
      %s44 = sadd.s32 1, %s40
    $region18: #{tpu_custom_call.1} parent=1 // loop_footer_branch
      %39 = sbr.rel target = $region14
    $region19: #{tpu_custom_call.1} parent=1 // loop_exit
      _
    %v47 = vld [vmem:[#allocation2] sm:$0xff]
    %v48 = vld [vmem:[#allocation2 + $0x8] sm:$0xff]
    %v49 = vmul.f32 %v47, 11.313708
    %v50 = vmul.f32 %v48, 11.313708
    %51 = vst [vmem:[#allocation6] sm:$0xff] %v49
    %52 = vst [vmem:[#allocation6 + $0x8] sm:$0xff] %v50
    // Predicated region
    $region20: #{tpu_custom_call.1} parent=1 // pred_check
      _
    $region21: #{tpu_custom_call.1} parent=1 // pred_check_branch
      %54 = sbr.rel (0) target = $region23
    $region22: #{tpu_custom_call.1} parent=1 // pred_region
      %s56 = ssub.s32 256, 256
      %57 = vsyncadd [#allocation7], %s56
      %s58 = sshll.u32 [#allocation6], 4
      %s59 = int_to_ptr.vmem [resolvable:$true] %s58
      %64 = dma.vmem_to_hbm [thread:$0]  %s59, 256, %s2, [#allocation7], 128, 128, 8
    $region23: #{tpu_custom_call.1} parent=1 // pred_fallthru
      _
    // Predicated region
    $region24: #{tpu_custom_call.1} parent=1 // pred_check
      _
    $region25: #{tpu_custom_call.1} parent=1 // pred_check_branch
      %66 = sbr.rel (0) target = $region27
    $region26: #{tpu_custom_call.1} parent=1 // pred_region
      %67 = dma.done [#allocation7], 256
    $region27: #{tpu_custom_call.1} parent=1 // pred_fallthru
      _
    %68 = vsyncpa [#allocation7], 1
  %69 = vsyncmov [#allocation3]
  %s70 = vpop.sfrf %69
  %p71 = scmp.eq.s32.totalorder %s70, 0
  %p72 = pneg %p71
  %74 = shalt.err (%p72)

</llo_original>
